<compile_context>
chip_gen: v6e
topology: v6e:2x2x1
jax: 0.10.0
libtpu: 0.0.40
codegen_flags: <defaults>
</compile_context>

<pallas_src>
import jax
import jax.numpy as jnp
from jax.experimental import pallas as pl
from jax.experimental.pallas import tpu as pltpu

IN_F = 5
HID_F = 6
OUT_F = 1

LANE = 128          # lane width (last axis of every block)
MAX_TILE_S = 512    # sublane rows per grid step -> 512*128 = 64K batch elems/step


def _round_up(n, m):
    return ((n + m - 1) // m) * m


def reflex_kernel(w1_ref, b1_ref, w2_ref, b2_ref, x_ref, o_ref):
    """x_ref: (IN_F, TILE_S, LANE) VMEM; o_ref: (TILE_S, LANE) VMEM.

    w1_ref: (IN_F, HID_F) SMEM, b1_ref: (HID_F,) SMEM,
    w2_ref: (HID_F,) SMEM, b2_ref: (OUT_F,) SMEM.
    """
    tile_shape = o_ref.shape
    # y = b2 + sum_j w2[j] * relu(b1[j] + sum_i w1[i, j] * x[i])
    y = jnp.full(tile_shape, b2_ref[0], dtype=jnp.float32)
    for j in range(HID_F):
        h = jnp.full(tile_shape, b1_ref[j], dtype=jnp.float32)
        for i in range(IN_F):
            # scalar (SMEM) * dense (TILE_S, LANE) plane -> VPU broadcast-FMA
            h = h + w1_ref[i, j] * x_ref[i]
        y = y + w2_ref[j] * jnp.maximum(h, 0.0)
    o_ref[...] = y.astype(o_ref.dtype)


def reflex_forward(x, w1, b1, w2, b2):
    """relu(x @ w1 + b1) @ w2 + b2 for x of shape (B, 5). Returns (B, 1)."""
    B = x.shape[0]
    s_min = pl.cdiv(B, LANE)                        # sublane rows needed
    tile_s = min(MAX_TILE_S, _round_up(s_min, 8))   # multiple of 8
    s_total = _round_up(s_min, tile_s)
    b_pad = s_total * LANE

    # Layout plumbing: batch onto (sublane, lane); features become leading dim.
    xt = jnp.pad(x.T, ((0, 0), (0, b_pad - B)))     # (IN_F, b_pad)
    xp = xt.reshape(IN_F, s_total, LANE)            # (IN_F, S, 128)

    grid = (s_total // tile_s,)
    smem = pl.BlockSpec(memory_space=pltpu.MemorySpace.SMEM)

    out_p = pl.pallas_call(
        reflex_kernel,
        out_shape=jax.ShapeDtypeStruct((s_total, LANE), x.dtype),
        grid=grid,
        in_specs=[
            smem,                                                    # w1 (5, 6)
            smem,                                                    # b1 (6,)
            smem,                                                    # w2 (6,)
            smem,                                                    # b2 (1,)
            pl.BlockSpec((IN_F, tile_s, LANE), lambda s: (0, s, 0)),  # x planes
        ],
        out_specs=pl.BlockSpec((tile_s, LANE), lambda s: (s, 0)),
        compiler_params=pltpu.CompilerParams(
            dimension_semantics=("parallel",),
            vmem_limit_bytes=32 * 1024 * 1024,
        ),
    )(w1, b1, w2, b2, xp)

    return out_p.reshape(b_pad, OUT_F)[:B]


def init_params(key):
    """Deterministic init mimicking nn.Linear's uniform(-1/sqrt(fan_in), ...).

    Weights are stored as (in_features, out_features) -- the transpose of
    PyTorch's nn.Linear.weight -- and the second layer's single output column
    is kept as a flat (HID_F,) vector.
    """
    k1, k2, k3, k4 = jax.random.split(key, 4)
    lim1 = 1.0 / jnp.sqrt(jnp.float32(IN_F))
    lim2 = 1.0 / jnp.sqrt(jnp.float32(HID_F))
    w1 = jax.random.uniform(k1, (IN_F, HID_F), jnp.float32, -lim1, lim1)
    b1 = jax.random.uniform(k2, (HID_F,), jnp.float32, -lim1, lim1)
    w2 = jax.random.uniform(k3, (HID_F,), jnp.float32, -lim2, lim2)
    b2 = jax.random.uniform(k4, (OUT_F,), jnp.float32, -lim2, lim2)
    return w1, b1, w2, b2


if __name__ == "__main__":
    key = jax.random.PRNGKey(0)
    kx, kp = jax.random.split(key)

    B = 64  # small test batch; kernel pads/tiles internally for any B
    x = jax.random.normal(kx, (B, IN_F), dtype=jnp.float32)
    w1, b1, w2, b2 = init_params(kp)

    out = jax.block_until_ready(reflex_forward(x, w1, b1, w2, b2))

    # Reference check in plain JAX (same math as the PyTorch module).
    ref = jnp.maximum(x @ w1 + b1[None, :], 0.0) @ w2[:, None] + b2[None, :]
    assert out.shape == (B, OUT_F)
    assert jnp.allclose(out, ref, atol=1e-5, rtol=1e-5)

    print("KERNEL_OK")
</pallas_src>

<mosaic_0001>
module attributes {stable_mosaic.version = 11 : i64} {
  func.func @reflex_kernel(%arg0: i32, %arg1: memref<5x6xf32, #tpu.memory_space<smem>>, %arg2: memref<6xf32, #tpu.memory_space<smem>>, %arg3: memref<6xf32, #tpu.memory_space<smem>>, %arg4: memref<1xf32, #tpu.memory_space<smem>>, %arg5: memref<5x8x128xf32, #tpu.memory_space<vmem>>, %arg6: memref<8x128xf32, #tpu.memory_space<vmem>>) attributes {dimension_semantics = [#tpu.dimension_semantics<parallel>], iteration_bounds = array<i64: 1>, scalar_prefetch = 0 : i64, scratch_operands = 0 : i64, tpu.core_type = #tpu.core_type<tc>, window_params = [{transform_indices = @transform_0, window_bounds = array<i64: 5, 6>}, {transform_indices = @transform_1, window_bounds = array<i64: 6>}, {transform_indices = @transform_2, window_bounds = array<i64: 6>}, {transform_indices = @transform_3, window_bounds = array<i64: 1>}, {transform_indices = @transform_4, window_bounds = array<i64: 5, 8, 128>}, {transform_indices = @transform_5, window_bounds = array<i64: 8, 128>}]} {
    %c0 = arith.constant 0 : index
    %0 = memref.load %arg4[%c0] : memref<1xf32, #tpu.memory_space<smem>>
    %1 = vector.broadcast %0 : f32 to vector<8x128xf32>
    %c0_0 = arith.constant 0 : index
    %2 = memref.load %arg2[%c0_0] : memref<6xf32, #tpu.memory_space<smem>>
    %3 = vector.broadcast %2 : f32 to vector<8x128xf32>
    %c0_1 = arith.constant 0 : index
    %c0_2 = arith.constant 0 : index
    %4 = memref.load %arg1[%c0_1, %c0_2] : memref<5x6xf32, #tpu.memory_space<smem>>
    %c0_3 = arith.constant 0 : index
    %c0_4 = arith.constant 0 : index
    %c0_5 = arith.constant 0 : index
    %5 = vector.load %arg5[%c0_3, %c0_4, %c0_5] : memref<5x8x128xf32, #tpu.memory_space<vmem>>, vector<1x8x128xf32>
    %6 = vector.shape_cast %5 : vector<1x8x128xf32> to vector<8x128xf32>
    %7 = vector.broadcast %4 : f32 to vector<8x128xf32>
    %8 = arith.mulf %7, %6 : vector<8x128xf32>
    %9 = arith.addf %3, %8 : vector<8x128xf32>
    %c1 = arith.constant 1 : index
    %c0_6 = arith.constant 0 : index
    %10 = memref.load %arg1[%c1, %c0_6] : memref<5x6xf32, #tpu.memory_space<smem>>
    %c1_7 = arith.constant 1 : index
    %c0_8 = arith.constant 0 : index
    %c0_9 = arith.constant 0 : index
    %11 = vector.load %arg5[%c1_7, %c0_8, %c0_9] : memref<5x8x128xf32, #tpu.memory_space<vmem>>, vector<1x8x128xf32>
    %12 = vector.shape_cast %11 : vector<1x8x128xf32> to vector<8x128xf32>
    %13 = vector.broadcast %10 : f32 to vector<8x128xf32>
    %14 = arith.mulf %13, %12 : vector<8x128xf32>
    %15 = arith.addf %9, %14 : vector<8x128xf32>
    %c2 = arith.constant 2 : index
    %c0_10 = arith.constant 0 : index
    %16 = memref.load %arg1[%c2, %c0_10] : memref<5x6xf32, #tpu.memory_space<smem>>
    %c2_11 = arith.constant 2 : index
    %c0_12 = arith.constant 0 : index
    %c0_13 = arith.constant 0 : index
    %17 = vector.load %arg5[%c2_11, %c0_12, %c0_13] : memref<5x8x128xf32, #tpu.memory_space<vmem>>, vector<1x8x128xf32>
    %18 = vector.shape_cast %17 : vector<1x8x128xf32> to vector<8x128xf32>
    %19 = vector.broadcast %16 : f32 to vector<8x128xf32>
    %20 = arith.mulf %19, %18 : vector<8x128xf32>
    %21 = arith.addf %15, %20 : vector<8x128xf32>
    %c3 = arith.constant 3 : index
    %c0_14 = arith.constant 0 : index
    %22 = memref.load %arg1[%c3, %c0_14] : memref<5x6xf32, #tpu.memory_space<smem>>
    %c3_15 = arith.constant 3 : index
    %c0_16 = arith.constant 0 : index
    %c0_17 = arith.constant 0 : index
    %23 = vector.load %arg5[%c3_15, %c0_16, %c0_17] : memref<5x8x128xf32, #tpu.memory_space<vmem>>, vector<1x8x128xf32>
    %24 = vector.shape_cast %23 : vector<1x8x128xf32> to vector<8x128xf32>
    %25 = vector.broadcast %22 : f32 to vector<8x128xf32>
    %26 = arith.mulf %25, %24 : vector<8x128xf32>
    %27 = arith.addf %21, %26 : vector<8x128xf32>
    %c4 = arith.constant 4 : index
    %c0_18 = arith.constant 0 : index
    %28 = memref.load %arg1[%c4, %c0_18] : memref<5x6xf32, #tpu.memory_space<smem>>
    %c4_19 = arith.constant 4 : index
    %c0_20 = arith.constant 0 : index
    %c0_21 = arith.constant 0 : index
    %29 = vector.load %arg5[%c4_19, %c0_20, %c0_21] : memref<5x8x128xf32, #tpu.memory_space<vmem>>, vector<1x8x128xf32>
    %30 = vector.shape_cast %29 : vector<1x8x128xf32> to vector<8x128xf32>
    %31 = vector.broadcast %28 : f32 to vector<8x128xf32>
    %32 = arith.mulf %31, %30 : vector<8x128xf32>
    %33 = arith.addf %27, %32 : vector<8x128xf32>
    %c0_22 = arith.constant 0 : index
    %34 = memref.load %arg3[%c0_22] : memref<6xf32, #tpu.memory_space<smem>>
    %cst = arith.constant 0.000000e+00 : f32
    %35 = vector.broadcast %cst : f32 to vector<8x128xf32>
    %36 = arith.maximumf %33, %35 : vector<8x128xf32>
    %37 = vector.broadcast %34 : f32 to vector<8x128xf32>
    %38 = arith.mulf %37, %36 : vector<8x128xf32>
    %39 = arith.addf %1, %38 : vector<8x128xf32>
    %c1_23 = arith.constant 1 : index
    %40 = memref.load %arg2[%c1_23] : memref<6xf32, #tpu.memory_space<smem>>
    %41 = vector.broadcast %40 : f32 to vector<8x128xf32>
    %c0_24 = arith.constant 0 : index
    %c1_25 = arith.constant 1 : index
    %42 = memref.load %arg1[%c0_24, %c1_25] : memref<5x6xf32, #tpu.memory_space<smem>>
    %c0_26 = arith.constant 0 : index
    %c0_27 = arith.constant 0 : index
    %c0_28 = arith.constant 0 : index
    %43 = vector.load %arg5[%c0_26, %c0_27, %c0_28] : memref<5x8x128xf32, #tpu.memory_space<vmem>>, vector<1x8x128xf32>
    %44 = vector.shape_cast %43 : vector<1x8x128xf32> to vector<8x128xf32>
    %45 = vector.broadcast %42 : f32 to vector<8x128xf32>
    %46 = arith.mulf %45, %44 : vector<8x128xf32>
    %47 = arith.addf %41, %46 : vector<8x128xf32>
    %c1_29 = arith.constant 1 : index
    %c1_30 = arith.constant 1 : index
    %48 = memref.load %arg1[%c1_29, %c1_30] : memref<5x6xf32, #tpu.memory_space<smem>>
    %c1_31 = arith.constant 1 : index
    %c0_32 = arith.constant 0 : index
    %c0_33 = arith.constant 0 : index
    %49 = vector.load %arg5[%c1_31, %c0_32, %c0_33] : memref<5x8x128xf32, #tpu.memory_space<vmem>>, vector<1x8x128xf32>
    %50 = vector.shape_cast %49 : vector<1x8x128xf32> to vector<8x128xf32>
    %51 = vector.broadcast %48 : f32 to vector<8x128xf32>
    %52 = arith.mulf %51, %50 : vector<8x128xf32>
    %53 = arith.addf %47, %52 : vector<8x128xf32>
    %c2_34 = arith.constant 2 : index
    %c1_35 = arith.constant 1 : index
    %54 = memref.load %arg1[%c2_34, %c1_35] : memref<5x6xf32, #tpu.memory_space<smem>>
    %c2_36 = arith.constant 2 : index
    %c0_37 = arith.constant 0 : index
    %c0_38 = arith.constant 0 : index
    %55 = vector.load %arg5[%c2_36, %c0_37, %c0_38] : memref<5x8x128xf32, #tpu.memory_space<vmem>>, vector<1x8x128xf32>
    %56 = vector.shape_cast %55 : vector<1x8x128xf32> to vector<8x128xf32>
    %57 = vector.broadcast %54 : f32 to vector<8x128xf32>
    %58 = arith.mulf %57, %56 : vector<8x128xf32>
    %59 = arith.addf %53, %58 : vector<8x128xf32>
    %c3_39 = arith.constant 3 : index
    %c1_40 = arith.constant 1 : index
    %60 = memref.load %arg1[%c3_39, %c1_40] : memref<5x6xf32, #tpu.memory_space<smem>>
    %c3_41 = arith.constant 3 : index
    %c0_42 = arith.constant 0 : index
    %c0_43 = arith.constant 0 : index
    %61 = vector.load %arg5[%c3_41, %c0_42, %c0_43] : memref<5x8x128xf32, #tpu.memory_space<vmem>>, vector<1x8x128xf32>
    %62 = vector.shape_cast %61 : vector<1x8x128xf32> to vector<8x128xf32>
    %63 = vector.broadcast %60 : f32 to vector<8x128xf32>
    %64 = arith.mulf %63, %62 : vector<8x128xf32>
    %65 = arith.addf %59, %64 : vector<8x128xf32>
    %c4_44 = arith.constant 4 : index
    %c1_45 = arith.constant 1 : index
    %66 = memref.load %arg1[%c4_44, %c1_45] : memref<5x6xf32, #tpu.memory_space<smem>>
    %c4_46 = arith.constant 4 : index
    %c0_47 = arith.constant 0 : index
    %c0_48 = arith.constant 0 : index
    %67 = vector.load %arg5[%c4_46, %c0_47, %c0_48] : memref<5x8x128xf32, #tpu.memory_space<vmem>>, vector<1x8x128xf32>
    %68 = vector.shape_cast %67 : vector<1x8x128xf32> to vector<8x128xf32>
    %69 = vector.broadcast %66 : f32 to vector<8x128xf32>
    %70 = arith.mulf %69, %68 : vector<8x128xf32>
    %71 = arith.addf %65, %70 : vector<8x128xf32>
    %c1_49 = arith.constant 1 : index
    %72 = memref.load %arg3[%c1_49] : memref<6xf32, #tpu.memory_space<smem>>
    %cst_50 = arith.constant 0.000000e+00 : f32
    %73 = vector.broadcast %cst_50 : f32 to vector<8x128xf32>
    %74 = arith.maximumf %71, %73 : vector<8x128xf32>
    %75 = vector.broadcast %72 : f32 to vector<8x128xf32>
    %76 = arith.mulf %75, %74 : vector<8x128xf32>
    %77 = arith.addf %39, %76 : vector<8x128xf32>
    %c2_51 = arith.constant 2 : index
    %78 = memref.load %arg2[%c2_51] : memref<6xf32, #tpu.memory_space<smem>>
    %79 = vector.broadcast %78 : f32 to vector<8x128xf32>
    %c0_52 = arith.constant 0 : index
    %c2_53 = arith.constant 2 : index
    %80 = memref.load %arg1[%c0_52, %c2_53] : memref<5x6xf32, #tpu.memory_space<smem>>
    %c0_54 = arith.constant 0 : index
    %c0_55 = arith.constant 0 : index
    %c0_56 = arith.constant 0 : index
    %81 = vector.load %arg5[%c0_54, %c0_55, %c0_56] : memref<5x8x128xf32, #tpu.memory_space<vmem>>, vector<1x8x128xf32>
    %82 = vector.shape_cast %81 : vector<1x8x128xf32> to vector<8x128xf32>
    %83 = vector.broadcast %80 : f32 to vector<8x128xf32>
    %84 = arith.mulf %83, %82 : vector<8x128xf32>
    %85 = arith.addf %79, %84 : vector<8x128xf32>
    %c1_57 = arith.constant 1 : index
    %c2_58 = arith.constant 2 : index
    %86 = memref.load %arg1[%c1_57, %c2_58] : memref<5x6xf32, #tpu.memory_space<smem>>
    %c1_59 = arith.constant 1 : index
    %c0_60 = arith.constant 0 : index
    %c0_61 = arith.constant 0 : index
    %87 = vector.load %arg5[%c1_59, %c0_60, %c0_61] : memref<5x8x128xf32, #tpu.memory_space<vmem>>, vector<1x8x128xf32>
    %88 = vector.shape_cast %87 : vector<1x8x128xf32> to vector<8x128xf32>
    %89 = vector.broadcast %86 : f32 to vector<8x128xf32>
    %90 = arith.mulf %89, %88 : vector<8x128xf32>
    %91 = arith.addf %85, %90 : vector<8x128xf32>
    %c2_62 = arith.constant 2 : index
    %c2_63 = arith.constant 2 : index
    %92 = memref.load %arg1[%c2_62, %c2_63] : memref<5x6xf32, #tpu.memory_space<smem>>
    %c2_64 = arith.constant 2 : index
    %c0_65 = arith.constant 0 : index
    %c0_66 = arith.constant 0 : index
    %93 = vector.load %arg5[%c2_64, %c0_65, %c0_66] : memref<5x8x128xf32, #tpu.memory_space<vmem>>, vector<1x8x128xf32>
    %94 = vector.shape_cast %93 : vector<1x8x128xf32> to vector<8x128xf32>
    %95 = vector.broadcast %92 : f32 to vector<8x128xf32>
    %96 = arith.mulf %95, %94 : vector<8x128xf32>
    %97 = arith.addf %91, %96 : vector<8x128xf32>
    %c3_67 = arith.constant 3 : index
    %c2_68 = arith.constant 2 : index
    %98 = memref.load %arg1[%c3_67, %c2_68] : memref<5x6xf32, #tpu.memory_space<smem>>
    %c3_69 = arith.constant 3 : index
    %c0_70 = arith.constant 0 : index
    %c0_71 = arith.constant 0 : index
    %99 = vector.load %arg5[%c3_69, %c0_70, %c0_71] : memref<5x8x128xf32, #tpu.memory_space<vmem>>, vector<1x8x128xf32>
    %100 = vector.shape_cast %99 : vector<1x8x128xf32> to vector<8x128xf32>
    %101 = vector.broadcast %98 : f32 to vector<8x128xf32>
    %102 = arith.mulf %101, %100 : vector<8x128xf32>
    %103 = arith.addf %97, %102 : vector<8x128xf32>
    %c4_72 = arith.constant 4 : index
    %c2_73 = arith.constant 2 : index
    %104 = memref.load %arg1[%c4_72, %c2_73] : memref<5x6xf32, #tpu.memory_space<smem>>
    %c4_74 = arith.constant 4 : index
    %c0_75 = arith.constant 0 : index
    %c0_76 = arith.constant 0 : index
    %105 = vector.load %arg5[%c4_74, %c0_75, %c0_76] : memref<5x8x128xf32, #tpu.memory_space<vmem>>, vector<1x8x128xf32>
    %106 = vector.shape_cast %105 : vector<1x8x128xf32> to vector<8x128xf32>
    %107 = vector.broadcast %104 : f32 to vector<8x128xf32>
    %108 = arith.mulf %107, %106 : vector<8x128xf32>
    %109 = arith.addf %103, %108 : vector<8x128xf32>
    %c2_77 = arith.constant 2 : index
    %110 = memref.load %arg3[%c2_77] : memref<6xf32, #tpu.memory_space<smem>>
    %cst_78 = arith.constant 0.000000e+00 : f32
    %111 = vector.broadcast %cst_78 : f32 to vector<8x128xf32>
    %112 = arith.maximumf %109, %111 : vector<8x128xf32>
    %113 = vector.broadcast %110 : f32 to vector<8x128xf32>
    %114 = arith.mulf %113, %112 : vector<8x128xf32>
    %115 = arith.addf %77, %114 : vector<8x128xf32>
    %c3_79 = arith.constant 3 : index
    %116 = memref.load %arg2[%c3_79] : memref<6xf32, #tpu.memory_space<smem>>
    %117 = vector.broadcast %116 : f32 to vector<8x128xf32>
    %c0_80 = arith.constant 0 : index
    %c3_81 = arith.constant 3 : index
    %118 = memref.load %arg1[%c0_80, %c3_81] : memref<5x6xf32, #tpu.memory_space<smem>>
    %c0_82 = arith.constant 0 : index
    %c0_83 = arith.constant 0 : index
    %c0_84 = arith.constant 0 : index
    %119 = vector.load %arg5[%c0_82, %c0_83, %c0_84] : memref<5x8x128xf32, #tpu.memory_space<vmem>>, vector<1x8x128xf32>
    %120 = vector.shape_cast %119 : vector<1x8x128xf32> to vector<8x128xf32>
    %121 = vector.broadcast %118 : f32 to vector<8x128xf32>
    %122 = arith.mulf %121, %120 : vector<8x128xf32>
    %123 = arith.addf %117, %122 : vector<8x128xf32>
    %c1_85 = arith.constant 1 : index
    %c3_86 = arith.constant 3 : index
    %124 = memref.load %arg1[%c1_85, %c3_86] : memref<5x6xf32, #tpu.memory_space<smem>>
    %c1_87 = arith.constant 1 : index
    %c0_88 = arith.constant 0 : index
    %c0_89 = arith.constant 0 : index
    %125 = vector.load %arg5[%c1_87, %c0_88, %c0_89] : memref<5x8x128xf32, #tpu.memory_space<vmem>>, vector<1x8x128xf32>
    %126 = vector.shape_cast %125 : vector<1x8x128xf32> to vector<8x128xf32>
    %127 = vector.broadcast %124 : f32 to vector<8x128xf32>
    %128 = arith.mulf %127, %126 : vector<8x128xf32>
    %129 = arith.addf %123, %128 : vector<8x128xf32>
    %c2_90 = arith.constant 2 : index
    %c3_91 = arith.constant 3 : index
    %130 = memref.load %arg1[%c2_90, %c3_91] : memref<5x6xf32, #tpu.memory_space<smem>>
    %c2_92 = arith.constant 2 : index
    %c0_93 = arith.constant 0 : index
    %c0_94 = arith.constant 0 : index
    %131 = vector.load %arg5[%c2_92, %c0_93, %c0_94] : memref<5x8x128xf32, #tpu.memory_space<vmem>>, vector<1x8x128xf32>
    %132 = vector.shape_cast %131 : vector<1x8x128xf32> to vector<8x128xf32>
    %133 = vector.broadcast %130 : f32 to vector<8x128xf32>
    %134 = arith.mulf %133, %132 : vector<8x128xf32>
    %135 = arith.addf %129, %134 : vector<8x128xf32>
    %c3_95 = arith.constant 3 : index
    %c3_96 = arith.constant 3 : index
    %136 = memref.load %arg1[%c3_95, %c3_96] : memref<5x6xf32, #tpu.memory_space<smem>>
    %c3_97 = arith.constant 3 : index
    %c0_98 = arith.constant 0 : index
    %c0_99 = arith.constant 0 : index
    %137 = vector.load %arg5[%c3_97, %c0_98, %c0_99] : memref<5x8x128xf32, #tpu.memory_space<vmem>>, vector<1x8x128xf32>
    %138 = vector.shape_cast %137 : vector<1x8x128xf32> to vector<8x128xf32>
    %139 = vector.broadcast %136 : f32 to vector<8x128xf32>
    %140 = arith.mulf %139, %138 : vector<8x128xf32>
    %141 = arith.addf %135, %140 : vector<8x128xf32>
    %c4_100 = arith.constant 4 : index
    %c3_101 = arith.constant 3 : index
    %142 = memref.load %arg1[%c4_100, %c3_101] : memref<5x6xf32, #tpu.memory_space<smem>>
    %c4_102 = arith.constant 4 : index
    %c0_103 = arith.constant 0 : index
    %c0_104 = arith.constant 0 : index
    %143 = vector.load %arg5[%c4_102, %c0_103, %c0_104] : memref<5x8x128xf32, #tpu.memory_space<vmem>>, vector<1x8x128xf32>
    %144 = vector.shape_cast %143 : vector<1x8x128xf32> to vector<8x128xf32>
    %145 = vector.broadcast %142 : f32 to vector<8x128xf32>
    %146 = arith.mulf %145, %144 : vector<8x128xf32>
    %147 = arith.addf %141, %146 : vector<8x128xf32>
    %c3_105 = arith.constant 3 : index
    %148 = memref.load %arg3[%c3_105] : memref<6xf32, #tpu.memory_space<smem>>
    %cst_106 = arith.constant 0.000000e+00 : f32
    %149 = vector.broadcast %cst_106 : f32 to vector<8x128xf32>
    %150 = arith.maximumf %147, %149 : vector<8x128xf32>
    %151 = vector.broadcast %148 : f32 to vector<8x128xf32>
    %152 = arith.mulf %151, %150 : vector<8x128xf32>
    %153 = arith.addf %115, %152 : vector<8x128xf32>
    %c4_107 = arith.constant 4 : index
    %154 = memref.load %arg2[%c4_107] : memref<6xf32, #tpu.memory_space<smem>>
    %155 = vector.broadcast %154 : f32 to vector<8x128xf32>
    %c0_108 = arith.constant 0 : index
    %c4_109 = arith.constant 4 : index
    %156 = memref.load %arg1[%c0_108, %c4_109] : memref<5x6xf32, #tpu.memory_space<smem>>
    %c0_110 = arith.constant 0 : index
    %c0_111 = arith.constant 0 : index
    %c0_112 = arith.constant 0 : index
    %157 = vector.load %arg5[%c0_110, %c0_111, %c0_112] : memref<5x8x128xf32, #tpu.memory_space<vmem>>, vector<1x8x128xf32>
    %158 = vector.shape_cast %157 : vector<1x8x128xf32> to vector<8x128xf32>
    %159 = vector.broadcast %156 : f32 to vector<8x128xf32>
    %160 = arith.mulf %159, %158 : vector<8x128xf32>
    %161 = arith.addf %155, %160 : vector<8x128xf32>
    %c1_113 = arith.constant 1 : index
    %c4_114 = arith.constant 4 : index
    %162 = memref.load %arg1[%c1_113, %c4_114] : memref<5x6xf32, #tpu.memory_space<smem>>
    %c1_115 = arith.constant 1 : index
    %c0_116 = arith.constant 0 : index
    %c0_117 = arith.constant 0 : index
    %163 = vector.load %arg5[%c1_115, %c0_116, %c0_117] : memref<5x8x128xf32, #tpu.memory_space<vmem>>, vector<1x8x128xf32>
    %164 = vector.shape_cast %163 : vector<1x8x128xf32> to vector<8x128xf32>
    %165 = vector.broadcast %162 : f32 to vector<8x128xf32>
    %166 = arith.mulf %165, %164 : vector<8x128xf32>
    %167 = arith.addf %161, %166 : vector<8x128xf32>
    %c2_118 = arith.constant 2 : index
    %c4_119 = arith.constant 4 : index
    %168 = memref.load %arg1[%c2_118, %c4_119] : memref<5x6xf32, #tpu.memory_space<smem>>
    %c2_120 = arith.constant 2 : index
    %c0_121 = arith.constant 0 : index
    %c0_122 = arith.constant 0 : index
    %169 = vector.load %arg5[%c2_120, %c0_121, %c0_122] : memref<5x8x128xf32, #tpu.memory_space<vmem>>, vector<1x8x128xf32>
    %170 = vector.shape_cast %169 : vector<1x8x128xf32> to vector<8x128xf32>
    %171 = vector.broadcast %168 : f32 to vector<8x128xf32>
    %172 = arith.mulf %171, %170 : vector<8x128xf32>
    %173 = arith.addf %167, %172 : vector<8x128xf32>
    %c3_123 = arith.constant 3 : index
    %c4_124 = arith.constant 4 : index
    %174 = memref.load %arg1[%c3_123, %c4_124] : memref<5x6xf32, #tpu.memory_space<smem>>
    %c3_125 = arith.constant 3 : index
    %c0_126 = arith.constant 0 : index
    %c0_127 = arith.constant 0 : index
    %175 = vector.load %arg5[%c3_125, %c0_126, %c0_127] : memref<5x8x128xf32, #tpu.memory_space<vmem>>, vector<1x8x128xf32>
    %176 = vector.shape_cast %175 : vector<1x8x128xf32> to vector<8x128xf32>
    %177 = vector.broadcast %174 : f32 to vector<8x128xf32>
    %178 = arith.mulf %177, %176 : vector<8x128xf32>
    %179 = arith.addf %173, %178 : vector<8x128xf32>
    %c4_128 = arith.constant 4 : index
    %c4_129 = arith.constant 4 : index
    %180 = memref.load %arg1[%c4_128, %c4_129] : memref<5x6xf32, #tpu.memory_space<smem>>
    %c4_130 = arith.constant 4 : index
    %c0_131 = arith.constant 0 : index
    %c0_132 = arith.constant 0 : index
    %181 = vector.load %arg5[%c4_130, %c0_131, %c0_132] : memref<5x8x128xf32, #tpu.memory_space<vmem>>, vector<1x8x128xf32>
    %182 = vector.shape_cast %181 : vector<1x8x128xf32> to vector<8x128xf32>
    %183 = vector.broadcast %180 : f32 to vector<8x128xf32>
    %184 = arith.mulf %183, %182 : vector<8x128xf32>
    %185 = arith.addf %179, %184 : vector<8x128xf32>
    %c4_133 = arith.constant 4 : index
    %186 = memref.load %arg3[%c4_133] : memref<6xf32, #tpu.memory_space<smem>>
    %cst_134 = arith.constant 0.000000e+00 : f32
    %187 = vector.broadcast %cst_134 : f32 to vector<8x128xf32>
    %188 = arith.maximumf %185, %187 : vector<8x128xf32>
    %189 = vector.broadcast %186 : f32 to vector<8x128xf32>
    %190 = arith.mulf %189, %188 : vector<8x128xf32>
    %191 = arith.addf %153, %190 : vector<8x128xf32>
    %c5 = arith.constant 5 : index
    %192 = memref.load %arg2[%c5] : memref<6xf32, #tpu.memory_space<smem>>
    %193 = vector.broadcast %192 : f32 to vector<8x128xf32>
    %c0_135 = arith.constant 0 : index
    %c5_136 = arith.constant 5 : index
    %194 = memref.load %arg1[%c0_135, %c5_136] : memref<5x6xf32, #tpu.memory_space<smem>>
    %c0_137 = arith.constant 0 : index
    %c0_138 = arith.constant 0 : index
    %c0_139 = arith.constant 0 : index
    %195 = vector.load %arg5[%c0_137, %c0_138, %c0_139] : memref<5x8x128xf32, #tpu.memory_space<vmem>>, vector<1x8x128xf32>
    %196 = vector.shape_cast %195 : vector<1x8x128xf32> to vector<8x128xf32>
    %197 = vector.broadcast %194 : f32 to vector<8x128xf32>
    %198 = arith.mulf %197, %196 : vector<8x128xf32>
    %199 = arith.addf %193, %198 : vector<8x128xf32>
    %c1_140 = arith.constant 1 : index
    %c5_141 = arith.constant 5 : index
    %200 = memref.load %arg1[%c1_140, %c5_141] : memref<5x6xf32, #tpu.memory_space<smem>>
    %c1_142 = arith.constant 1 : index
    %c0_143 = arith.constant 0 : index
    %c0_144 = arith.constant 0 : index
    %201 = vector.load %arg5[%c1_142, %c0_143, %c0_144] : memref<5x8x128xf32, #tpu.memory_space<vmem>>, vector<1x8x128xf32>
    %202 = vector.shape_cast %201 : vector<1x8x128xf32> to vector<8x128xf32>
    %203 = vector.broadcast %200 : f32 to vector<8x128xf32>
    %204 = arith.mulf %203, %202 : vector<8x128xf32>
    %205 = arith.addf %199, %204 : vector<8x128xf32>
    %c2_145 = arith.constant 2 : index
    %c5_146 = arith.constant 5 : index
    %206 = memref.load %arg1[%c2_145, %c5_146] : memref<5x6xf32, #tpu.memory_space<smem>>
    %c2_147 = arith.constant 2 : index
    %c0_148 = arith.constant 0 : index
    %c0_149 = arith.constant 0 : index
    %207 = vector.load %arg5[%c2_147, %c0_148, %c0_149] : memref<5x8x128xf32, #tpu.memory_space<vmem>>, vector<1x8x128xf32>
    %208 = vector.shape_cast %207 : vector<1x8x128xf32> to vector<8x128xf32>
    %209 = vector.broadcast %206 : f32 to vector<8x128xf32>
    %210 = arith.mulf %209, %208 : vector<8x128xf32>
    %211 = arith.addf %205, %210 : vector<8x128xf32>
    %c3_150 = arith.constant 3 : index
    %c5_151 = arith.constant 5 : index
    %212 = memref.load %arg1[%c3_150, %c5_151] : memref<5x6xf32, #tpu.memory_space<smem>>
    %c3_152 = arith.constant 3 : index
    %c0_153 = arith.constant 0 : index
    %c0_154 = arith.constant 0 : index
    %213 = vector.load %arg5[%c3_152, %c0_153, %c0_154] : memref<5x8x128xf32, #tpu.memory_space<vmem>>, vector<1x8x128xf32>
    %214 = vector.shape_cast %213 : vector<1x8x128xf32> to vector<8x128xf32>
    %215 = vector.broadcast %212 : f32 to vector<8x128xf32>
    %216 = arith.mulf %215, %214 : vector<8x128xf32>
    %217 = arith.addf %211, %216 : vector<8x128xf32>
    %c4_155 = arith.constant 4 : index
    %c5_156 = arith.constant 5 : index
    %218 = memref.load %arg1[%c4_155, %c5_156] : memref<5x6xf32, #tpu.memory_space<smem>>
    %c4_157 = arith.constant 4 : index
    %c0_158 = arith.constant 0 : index
    %c0_159 = arith.constant 0 : index
    %219 = vector.load %arg5[%c4_157, %c0_158, %c0_159] : memref<5x8x128xf32, #tpu.memory_space<vmem>>, vector<1x8x128xf32>
    %220 = vector.shape_cast %219 : vector<1x8x128xf32> to vector<8x128xf32>
    %221 = vector.broadcast %218 : f32 to vector<8x128xf32>
    %222 = arith.mulf %221, %220 : vector<8x128xf32>
    %223 = arith.addf %217, %222 : vector<8x128xf32>
    %c5_160 = arith.constant 5 : index
    %224 = memref.load %arg3[%c5_160] : memref<6xf32, #tpu.memory_space<smem>>
    %cst_161 = arith.constant 0.000000e+00 : f32
    %225 = vector.broadcast %cst_161 : f32 to vector<8x128xf32>
    %226 = arith.maximumf %223, %225 : vector<8x128xf32>
    %227 = vector.broadcast %224 : f32 to vector<8x128xf32>
    %228 = arith.mulf %227, %226 : vector<8x128xf32>
    %229 = arith.addf %191, %228 : vector<8x128xf32>
    %c0_162 = arith.constant 0 : index
    %c0_163 = arith.constant 0 : index
    %230 = vector.load %arg6[%c0_162, %c0_163] : memref<8x128xf32, #tpu.memory_space<vmem>>, vector<8x128xf32>
    tpu.vector_store %arg6[%c0_162, %c0_163], %229 {strides = array<i32>} : memref<8x128xf32, #tpu.memory_space<vmem>>, vector<8x128xf32>,
    return
  }
  func.func @transform_0(%arg0: i32) -> (i32, i32) {
    %c0_i32 = arith.constant 0 : i32
    %c0_i32_0 = arith.constant 0 : i32
    %c0_i32_1 = arith.constant 0 : i32
    return %c0_i32, %c0_i32_0 : i32, i32
  }
  func.func @transform_1(%arg0: i32) -> i32 {
    %c0_i32 = arith.constant 0 : i32
    %c0_i32_0 = arith.constant 0 : i32
    return %c0_i32 : i32
  }
  func.func @transform_2(%arg0: i32) -> i32 {
    %c0_i32 = arith.constant 0 : i32
    %c0_i32_0 = arith.constant 0 : i32
    return %c0_i32 : i32
  }
  func.func @transform_3(%arg0: i32) -> i32 {
    %c0_i32 = arith.constant 0 : i32
    %c0_i32_0 = arith.constant 0 : i32
    return %c0_i32 : i32
  }
  func.func @transform_4(%arg0: i32) -> (i32, i32, i32) {
    %c0_i32 = arith.constant 0 : i32
    %c0_i32_0 = arith.constant 0 : i32
    %c0_i32_1 = arith.constant 0 : i32
    return %c0_i32, %arg0, %c0_i32_0 : i32, i32, i32
  }
  func.func @transform_5(%arg0: i32) -> (i32, i32) {
    %c0_i32 = arith.constant 0 : i32
    %c0_i32_0 = arith.constant 0 : i32
    return %arg0, %c0_i32 : i32, i32
  }
}

</mosaic_0001>

<llo_original>
// kernel: tpu_custom_call.1
$region0: #{tpu_custom_call.1}
  #allocation0 [shape = 'u32[]', space=smem, size = 0x4, offset = 0x4, fixed_abs, tag = 'smem constant byte address 0x4 - core index']
  #allocation1 [shape = 'u32[144,128]{1,0:T(1,128)}', space=vmem, size = 0x12000, scoped, tag = 'internal scratch']
  #allocation2 [shape = 'f32[1]{0:T(128)S(6)}', space=smem, size = 0x200, scoped, tag = 'scoped memory for tpu_custom_call.1']
  %s0 = inlined_call_operand.hbm [shape: f32[5,6], index: 0, kind: input, shape index: {}]
  %s1 = inlined_call_operand.vmem [shape: f32[6], index: 1, kind: input, shape index: {}]
  %s2 = inlined_call_operand.vmem [shape: f32[6], index: 2, kind: input, shape index: {}]
  %s3 = inlined_call_operand.<no memory space> [shape: f32[1], index: 3, kind: input, shape index: {}]
  %s4 = inlined_call_operand.hbm [shape: f32[5,8,128], index: 4, kind: input, shape index: {}]
  %s5 = inlined_call_operand.hbm [shape: f32[8,128], index: 5, kind: output, shape index: {}]
  %s6 = sld [smem:[#allocation0]]
  $region46: #{tpu_custom_call.1} parent=0
    _
  %s8 = ssub.s32 1, %s6
  %s9 = scalar_select 0, %s8, %s6
  %10 = sst [smem:[#allocation2]] %s3
  $region1: #{tpu_custom_call.1} parent=0
    #allocation3 [shape = 'u8[4096]{0}', space=smem, size = 0x1000, scoped, tag = 'input window, operand 0, single buffered']
    #allocation4 [shape = 's32[1]{0}', space=sflag, size = 0x4, scoped, tag = 'scoped memory for tpu_custom_call.1']
    #allocation5 [shape = 's32[1]{0}', space=sflag, size = 0x4, scoped, tag = 'scoped memory for tpu_custom_call.1']
    #allocation6 [shape = 's32[1]{0}', space=sflag, size = 0x4, scoped, tag = 'scoped memory for tpu_custom_call.1']
    #allocation7 [shape = 's32[1]{0}', space=sflag, size = 0x4, scoped, tag = 'scoped memory for tpu_custom_call.1']
    #allocation8 [shape = 'u8[512]{0}', space=smem, size = 0x200, scoped, tag = 'input window, operand 1, single buffered']
    #allocation9 [shape = 'u8[512]{0}', space=smem, size = 0x200, scoped, tag = 'input window, operand 2, single buffered']
    #allocation10 [shape = 's32[1]{0}', space=sflag, size = 0x4, scoped, tag = 'scoped memory for tpu_custom_call.1']
    #allocation11 [shape = 'u8[20480]{0}', space=vmem, size = 0x5000, scoped, tag = 'input window, operand 4, single buffered']
    #allocation12 [shape = 'u8[4096]{0}', space=vmem, size = 0x1000, scoped, tag = 'output window, operand 0, single buffered']
    %11 = vsyncpa [#allocation6], 0
    %12 = vsyncpa [#allocation7], 0
    %13 = vsyncpa [#allocation10], 0
    %14 = vsyncpa [#allocation4], 0
    %15 = vsyncpa [#allocation5], 0
    // Predicated region
    $region2: #{tpu_custom_call.1} parent=1 // pred_check
      _
    $region3: #{tpu_custom_call.1} parent=1 // pred_check_branch
      %17 = sbr.rel (0) target = $region5
    $region4: #{tpu_custom_call.1} parent=1 // pred_region
      %s19 = ssub.s32 128, 128
      %20 = vsyncadd [#allocation6], %s19
      %23 = dma.hbm_to_smem %s0, 128, [#allocation3], [#allocation6]
    $region5: #{tpu_custom_call.1} parent=1 // pred_fallthru
      _
    // Predicated region
    $region6: #{tpu_custom_call.1} parent=1 // pred_check
      _
    $region7: #{tpu_custom_call.1} parent=1 // pred_check_branch
      %25 = sbr.rel (0) target = $region9
    $region8: #{tpu_custom_call.1} parent=1 // pred_region
      %s27 = ssub.s32 16, 16
      %28 = vsyncadd [#allocation7], %s27
      %s30 = sshll.u32 %s1, 4
      %s31 = int_to_ptr.vmem [resolvable:$true] %s30
      %33 = dma.vmem_to_smem %s31, 16, [#allocation8], [#allocation7]
    $region9: #{tpu_custom_call.1} parent=1 // pred_fallthru
      _
    // Predicated region
    $region10: #{tpu_custom_call.1} parent=1 // pred_check
      _
    $region11: #{tpu_custom_call.1} parent=1 // pred_check_branch
      %35 = sbr.rel (0) target = $region13
    $region12: #{tpu_custom_call.1} parent=1 // pred_region
      %s37 = ssub.s32 16, 16
      %38 = vsyncadd [#allocation10], %s37
      %s40 = sshll.u32 %s2, 4
      %s41 = int_to_ptr.vmem [resolvable:$true] %s40
      %43 = dma.vmem_to_smem %s41, 16, [#allocation9], [#allocation10]
    $region13: #{tpu_custom_call.1} parent=1 // pred_fallthru
      _
    // Predicated region
    $region14: #{tpu_custom_call.1} parent=1 // pred_check
      _
    $region15: #{tpu_custom_call.1} parent=1 // pred_check_branch
      %45 = sbr.rel (0) target = $region17
    $region16: #{tpu_custom_call.1} parent=1 // pred_region
      _
    $region17: #{tpu_custom_call.1} parent=1 // pred_fallthru
      _
    // Predicated region
    $region18: #{tpu_custom_call.1} parent=1 // pred_check
      _
    $region19: #{tpu_custom_call.1} parent=1 // pred_check_branch
      %47 = sbr.rel (0) target = $region21
    $region20: #{tpu_custom_call.1} parent=1 // pred_region
      %s49 = ssub.s32 640, 640
      %50 = vsyncadd [#allocation4], %s49
      %s51 = sshll.u32 [#allocation11], 4
      %s52 = int_to_ptr.vmem [resolvable:$true] %s51
      %57 = dma.hbm_to_vmem [thread:$0]  %s4, 640, %s52, [#allocation4], 128, 128, 8
    $region21: #{tpu_custom_call.1} parent=1 // pred_fallthru
      _
    // Predicated region
    $region22: #{tpu_custom_call.1} parent=1 // pred_check
      _
    $region23: #{tpu_custom_call.1} parent=1 // pred_check_branch
      %59 = sbr.rel (0) target = $region25
    $region24: #{tpu_custom_call.1} parent=1 // pred_region
      %60 = dma.done [#allocation6], 128
    $region25: #{tpu_custom_call.1} parent=1 // pred_fallthru
      _
    // Predicated region
    $region26: #{tpu_custom_call.1} parent=1 // pred_check
      _
    $region27: #{tpu_custom_call.1} parent=1 // pred_check_branch
      %62 = sbr.rel (0) target = $region29
    $region28: #{tpu_custom_call.1} parent=1 // pred_region
      %63 = dma.done [#allocation7], 16
    $region29: #{tpu_custom_call.1} parent=1 // pred_fallthru
      _
    // Predicated region
    $region30: #{tpu_custom_call.1} parent=1 // pred_check
      _
    $region31: #{tpu_custom_call.1} parent=1 // pred_check_branch
      %65 = sbr.rel (0) target = $region33
    $region32: #{tpu_custom_call.1} parent=1 // pred_region
      %66 = dma.done [#allocation10], 16
    $region33: #{tpu_custom_call.1} parent=1 // pred_fallthru
      _
    // Predicated region
    $region34: #{tpu_custom_call.1} parent=1 // pred_check
      _
    $region35: #{tpu_custom_call.1} parent=1 // pred_check_branch
      %68 = sbr.rel (0) target = $region37
    $region36: #{tpu_custom_call.1} parent=1 // pred_region
      %69 = dma.done [#allocation4], 640
    $region37: #{tpu_custom_call.1} parent=1 // pred_fallthru
      _
    %70 = sfence
    %s71 = sld [smem:[#allocation2]]
    %v72 = vstv %s71
    %s73 = sld [smem:[#allocation8]]
    %v74 = vstv %s73
    %s75 = sld [smem:[#allocation3]]
    %v76 = vld [vmem:[#allocation11] sm:$0xff]
    %v77 = vstv %s75
    %v78 = vmul.f32 %v77, %v76
    %v79 = vadd.f32 %v74, %v78
    %s80 = sld [smem:[#allocation3 + $0x80]]
    %s81 = scalar_lea.vmem [#allocation11], 8
    %v82 = vld [vmem:[%s81] sm:$0xff]
    %v83 = vstv %s80
    %v84 = vmul.f32 %v83, %v82
    %v85 = vadd.f32 %v79, %v84
    %s86 = sld [smem:[#allocation3 + $0x100]]
    %s87 = scalar_lea.vmem [#allocation11], 16
    %v88 = vld [vmem:[%s87] sm:$0xff]
    %v89 = vstv %s86
    %v90 = vmul.f32 %v89, %v88
    %v91 = vadd.f32 %v85, %v90
    %s92 = sld [smem:[#allocation3 + $0x180]]
    %s93 = scalar_lea.vmem [#allocation11], 24
    %v94 = vld [vmem:[%s93] sm:$0xff]
    %v95 = vstv %s92
    %v96 = vmul.f32 %v95, %v94
    %v97 = vadd.f32 %v91, %v96
    %s98 = sld [smem:[#allocation3 + $0x200]]
    %s99 = scalar_lea.vmem [#allocation11], 32
    %v100 = vld [vmem:[%s99] sm:$0xff]
    %v101 = vstv %s98
    %v102 = vmul.f32 %v101, %v100
    %v103 = vadd.f32 %v97, %v102
    %s104 = sld [smem:[#allocation9]]
    %v105 = vmax.f32 %v103, 0.0
    %v106 = vstv %s104
    %v107 = vmul.f32 %v106, %v105
    %v108 = vadd.f32 %v72, %v107
    %s109 = sld [smem:[#allocation8 + $0x1]]
    %v110 = vstv %s109
    %s111 = sld [smem:[#allocation3 + $0x1]]
    %v112 = vstv %s111
    %v113 = vmul.f32 %v112, %v76
    %v114 = vadd.f32 %v110, %v113
    %s115 = sld [smem:[#allocation3 + $0x81]]
    %v116 = vstv %s115
    %v117 = vmul.f32 %v116, %v82
    %v118 = vadd.f32 %v114, %v117
    %s119 = sld [smem:[#allocation3 + $0x101]]
    %v120 = vstv %s119
    %v121 = vmul.f32 %v120, %v88
    %v122 = vadd.f32 %v118, %v121
    %s123 = sld [smem:[#allocation3 + $0x181]]
    %v124 = vstv %s123
    %v125 = vmul.f32 %v124, %v94
    %v126 = vadd.f32 %v122, %v125
    %s127 = sld [smem:[#allocation3 + $0x201]]
    %v128 = vstv %s127
    %v129 = vmul.f32 %v128, %v100
    %v130 = vadd.f32 %v126, %v129
    %s131 = sld [smem:[#allocation9 + $0x1]]
    %v132 = vmax.f32 %v130, 0.0
    %v133 = vstv %s131
    %v134 = vmul.f32 %v133, %v132
    %v135 = vadd.f32 %v108, %v134
    %s136 = sld [smem:[#allocation8 + $0x2]]
    %v137 = vstv %s136
    %s138 = sld [smem:[#allocation3 + $0x2]]
    %v139 = vstv %s138
    %v140 = vmul.f32 %v139, %v76
    %v141 = vadd.f32 %v137, %v140
    %s142 = sld [smem:[#allocation3 + $0x82]]
    %v143 = vstv %s142
    %v144 = vmul.f32 %v143, %v82
    %v145 = vadd.f32 %v141, %v144
    %s146 = sld [smem:[#allocation3 + $0x102]]
    %v147 = vstv %s146
    %v148 = vmul.f32 %v147, %v88
    %v149 = vadd.f32 %v145, %v148
    %s150 = sld [smem:[#allocation3 + $0x182]]
    %v151 = vstv %s150
    %v152 = vmul.f32 %v151, %v94
    %v153 = vadd.f32 %v149, %v152
    %s154 = sld [smem:[#allocation3 + $0x202]]
    %v155 = vstv %s154
    %v156 = vmul.f32 %v155, %v100
    %v157 = vadd.f32 %v153, %v156
    %s158 = sld [smem:[#allocation9 + $0x2]]
    %v159 = vmax.f32 %v157, 0.0
    %v160 = vstv %s158
    %v161 = vmul.f32 %v160, %v159
    %v162 = vadd.f32 %v135, %v161
    %s163 = sld [smem:[#allocation8 + $0x3]]
    %v164 = vstv %s163
    %s165 = sld [smem:[#allocation3 + $0x3]]
    %v166 = vstv %s165
    %v167 = vmul.f32 %v166, %v76
    %v168 = vadd.f32 %v164, %v167
    %s169 = sld [smem:[#allocation3 + $0x83]]
    %v170 = vstv %s169
    %v171 = vmul.f32 %v170, %v82
    %v172 = vadd.f32 %v168, %v171
    %s173 = sld [smem:[#allocation3 + $0x103]]
    %v174 = vstv %s173
    %v175 = vmul.f32 %v174, %v88
    %v176 = vadd.f32 %v172, %v175
    %s177 = sld [smem:[#allocation3 + $0x183]]
    %v178 = vstv %s177
    %v179 = vmul.f32 %v178, %v94
    %v180 = vadd.f32 %v176, %v179
    %s181 = sld [smem:[#allocation3 + $0x203]]
    %v182 = vstv %s181
    %v183 = vmul.f32 %v182, %v100
    %v184 = vadd.f32 %v180, %v183
    %s185 = sld [smem:[#allocation9 + $0x3]]
    %v186 = vmax.f32 %v184, 0.0
    %v187 = vstv %s185
    %v188 = vmul.f32 %v187, %v186
    %v189 = vadd.f32 %v162, %v188
    %s190 = sld [smem:[#allocation8 + $0x4]]
    %v191 = vstv %s190
    %s192 = sld [smem:[#allocation3 + $0x4]]
    %v193 = vstv %s192
    %v194 = vmul.f32 %v193, %v76
    %v195 = vadd.f32 %v191, %v194
    %s196 = sld [smem:[#allocation3 + $0x84]]
    %v197 = vstv %s196
    %v198 = vmul.f32 %v197, %v82
    %v199 = vadd.f32 %v195, %v198
    %s200 = sld [smem:[#allocation3 + $0x104]]
    %v201 = vstv %s200
    %v202 = vmul.f32 %v201, %v88
    %v203 = vadd.f32 %v199, %v202
    %s204 = sld [smem:[#allocation3 + $0x184]]
    %v205 = vstv %s204
    %v206 = vmul.f32 %v205, %v94
    %v207 = vadd.f32 %v203, %v206
    %s208 = sld [smem:[#allocation3 + $0x204]]
    %v209 = vstv %s208
    %v210 = vmul.f32 %v209, %v100
    %v211 = vadd.f32 %v207, %v210
    %s212 = sld [smem:[#allocation9 + $0x4]]
    %v213 = vmax.f32 %v211, 0.0
    %v214 = vstv %s212
    %v215 = vmul.f32 %v214, %v213
    %v216 = vadd.f32 %v189, %v215
    %s217 = sld [smem:[#allocation8 + $0x5]]
    %v218 = vstv %s217
    %s219 = sld [smem:[#allocation3 + $0x5]]
    %v220 = vstv %s219
    %v221 = vmul.f32 %v220, %v76
    %v222 = vadd.f32 %v218, %v221
    %s223 = sld [smem:[#allocation3 + $0x85]]
    %v224 = vstv %s223
    %v225 = vmul.f32 %v224, %v82
    %v226 = vadd.f32 %v222, %v225
    %s227 = sld [smem:[#allocation3 + $0x105]]
    %v228 = vstv %s227
    %v229 = vmul.f32 %v228, %v88
    %v230 = vadd.f32 %v226, %v229
    %s231 = sld [smem:[#allocation3 + $0x185]]
    %v232 = vstv %s231
    %v233 = vmul.f32 %v232, %v94
    %v234 = vadd.f32 %v230, %v233
    %s235 = sld [smem:[#allocation3 + $0x205]]
    %v236 = vstv %s235
    %v237 = vmul.f32 %v236, %v100
    %v238 = vadd.f32 %v234, %v237
    %s239 = sld [smem:[#allocation9 + $0x5]]
    %v240 = vmax.f32 %v238, 0.0
    %v241 = vstv %s239
    %v242 = vmul.f32 %v241, %v240
    %v243 = vadd.f32 %v216, %v242
    %244 = vst [vmem:[#allocation12] sm:$0xff] %v243
    // Predicated region
    $region38: #{tpu_custom_call.1} parent=1 // pred_check
      _
    $region39: #{tpu_custom_call.1} parent=1 // pred_check_branch
      %246 = sbr.rel (0) target = $region41
    $region40: #{tpu_custom_call.1} parent=1 // pred_region
      %s248 = ssub.s32 128, 128
      %249 = vsyncadd [#allocation5], %s248
      %s251 = sshll.u32 [#allocation12], 4
      %s252 = int_to_ptr.vmem [resolvable:$true] %s251
      %254 = dma.vmem_to_hbm [thread:$0]  %s252, 128, %s5, [#allocation5]
    $region41: #{tpu_custom_call.1} parent=1 // pred_fallthru
      _
    // Predicated region
    $region42: #{tpu_custom_call.1} parent=1 // pred_check
      _
    $region43: #{tpu_custom_call.1} parent=1 // pred_check_branch
      %256 = sbr.rel (0) target = $region45
    $region44: #{tpu_custom_call.1} parent=1 // pred_region
      %257 = dma.done [#allocation5], 128
    $region45: #{tpu_custom_call.1} parent=1 // pred_fallthru
      _
    %258 = vsyncpa [#allocation4], 1
    %259 = vsyncpa [#allocation5], 1
    %260 = vsyncpa [#allocation6], 1
    %261 = vsyncpa [#allocation7], 1
    %262 = vsyncpa [#allocation10], 1

</llo_original>
